<compile_context>
chip_gen: v6e
topology: v6e:2x2x1
jax: 0.10.0
libtpu: 0.0.40
codegen_flags: <defaults>
</compile_context>

<pallas_src>
import functools

import jax
import jax.numpy as jnp
from jax import lax
from jax.experimental import pallas as pl
from jax.experimental.pallas import tpu as pltpu

EPS = 1e-5
_TILE_TARGET_BYTES = 4 << 20       # per pipeline buffer (HBM-roofline knee)
_MIN_PALLAS_ELEMENTS = 1 << 15     # below this, fused XLA is strictly faster


def _cdiv(a, b):
    return -(-a // b)


def _vmem_cap_bytes():
    """3/4 of physical VMEM, capped at 96 MiB (v5e/v6e: 96, v7x: 48)."""
    try:
        phys = int(pltpu.get_tpu_info().vmem_capacity_bytes)
    except Exception:
        phys = 64 << 20            # conservative: v7x per-TensorCore VMEM
    return int(min(96 << 20, (phys * 3) // 4))


def _group_norm_kernel(x_ref, o_ref, *, inv_k, eps):
    # x_ref / o_ref: (tm, K).  Each row is exactly one normalization group,
    # so rows are fully independent (partial boundary blocks are harmless).
    x = x_ref[...].astype(jnp.float32)                 # no-op copy for f32 input
    mean = jnp.sum(x, axis=-1, keepdims=True) * jnp.float32(inv_k)
    centered = x - mean
    var = jnp.sum(centered * centered, axis=-1, keepdims=True) * jnp.float32(inv_k)
    inv_std = lax.rsqrt(var + jnp.float32(eps))        # EUP slot: ~free here
    o_ref[...] = (centered * inv_std).astype(o_ref.dtype)


def _group_norm_xla(x, num_groups=2, eps=EPS):
    """Pure-XLA reference / tiny-shape fallback."""
    n, c, h, w = x.shape
    xg = x.reshape(n, num_groups, -1).astype(jnp.float32)
    mean = jnp.mean(xg, axis=-1, keepdims=True)
    var = jnp.mean(jnp.square(xg - mean), axis=-1, keepdims=True)
    y = (xg - mean) * lax.rsqrt(var + eps)
    return y.reshape(n, c, h, w).astype(x.dtype)


def group_norm_pallas(x, num_groups=2, eps=EPS):
    n, c, h, w = x.shape
    assert c % num_groups == 0
    k = (c // num_groups) * h * w
    ng = n * num_groups
    itemsize = x.dtype.itemsize

    vmem_cap = _vmem_cap_bytes()
    # Per-row VMEM footprint: 2 input + 2 output pipeline buffers (x.dtype)
    # plus ~3 full-tile f32 intermediates (f32 view, centered, store temp).
    row_bytes_all = k * (4 * itemsize + 3 * 4)
    tm_fit = (vmem_cap - (4 << 20)) // row_bytes_all   # leave headroom

    # Row tile: ~4 MiB per pipeline buffer, >=4 grid steps when the batch
    # allows (v7x TC balance), multiple of 8 sublanes unless it spans the
    # whole row dim, and within the VMEM budget.
    tm = max(8, _TILE_TARGET_BYTES // (k * itemsize))
    if ng >= 32:
        tm = min(tm, max(8, _cdiv(ng, 4)))
    tm = min(tm, tm_fit, ng)
    if tm < ng:
        tm = (tm // 8) * 8
        if tm < 8:
            # A legal (>=8-row) tile does not fit in VMEM for this K.
            # TODO(synk): k-tiled two-level reduction (trailing "arbitrary"
            # grid axis with sum / sum-sq VMEM accumulators + normalize pass)
            # instead of falling back to XLA.
            return _group_norm_xla(x, num_groups, eps)
    grid = _cdiv(ng, tm)

    x2d = x.reshape(ng, k)            # contiguous -> free reshape, no pad/copy
    kernel = functools.partial(_group_norm_kernel, inv_k=1.0 / k, eps=eps)

    out2d = pl.pallas_call(
        kernel,
        out_shape=jax.ShapeDtypeStruct((ng, k), x.dtype),
        grid=(grid,),
        in_specs=[pl.BlockSpec((tm, k), lambda i: (i, 0))],
        out_specs=pl.BlockSpec((tm, k), lambda i: (i, 0)),
        compiler_params=pltpu.CompilerParams(
            dimension_semantics=("parallel",),
            vmem_limit_bytes=vmem_cap,
        ),
    )(x2d)
    return out2d.reshape(n, c, h, w)


def group_norm(x, num_groups=2, eps=EPS):
    """Matches torch.ops.aten.group_norm(x, G, None, None, eps, False)."""
    if x.size < _MIN_PALLAS_ELEMENTS:
        # pallas_call launch / per-step overhead dominates at this size.
        return _group_norm_xla(x, num_groups, eps)
    return group_norm_pallas(x, num_groups, eps)


if __name__ == "__main__":
    key = jax.random.PRNGKey(0)

    # Module-annotated shape: [2, 4, 6, 7] float32, num_groups=2.
    x = jax.random.normal(key, (2, 4, 6, 7), dtype=jnp.float32)
    ref = _group_norm_xla(x, num_groups=2)

    # Force the Pallas path at the module's shape.
    out = jax.block_until_ready(group_norm_pallas(x, num_groups=2))
    assert out.shape == (2, 4, 6, 7) and out.dtype == jnp.float32
    assert jnp.allclose(out, ref, atol=2e-5, rtol=2e-5)

    # Dispatcher (tiny-shape XLA fallback) must agree.
    out_d = jax.block_until_ready(group_norm(x, num_groups=2))
    assert jnp.allclose(out_d, ref, atol=2e-5, rtol=2e-5)

    # Larger batch exercising the multi-step, multiple-of-8 row tiling
    # (ng=512 -> tm=128, grid=4, partial-free blocks).
    x2 = jax.random.normal(jax.random.PRNGKey(0), (256, 4, 6, 7), dtype=jnp.float32)
    out2 = jax.block_until_ready(group_norm_pallas(x2, num_groups=2))
    ref2 = _group_norm_xla(x2, num_groups=2)
    assert jnp.allclose(out2, ref2, atol=2e-5, rtol=2e-5)

    print("KERNEL_OK")
</pallas_src>

<mosaic_0001>
module attributes {stable_mosaic.version = 11 : i64} {
  func.func @_group_norm_kernel(%arg0: i32, %arg1: memref<4x84xf32, #tpu.memory_space<vmem>>, %arg2: memref<4x84xf32, #tpu.memory_space<vmem>>) attributes {dimension_semantics = [#tpu.dimension_semantics<parallel>], iteration_bounds = array<i64: 1>, scalar_prefetch = 0 : i64, scratch_operands = 0 : i64, tpu.core_type = #tpu.core_type<tc>, window_params = [{transform_indices = @transform_0, window_bounds = array<i64: 4, 84>}, {transform_indices = @transform_1, window_bounds = array<i64: 4, 84>}]} {
    %c0 = arith.constant 0 : index
    %c0_0 = arith.constant 0 : index
    %0 = vector.load %arg1[%c0, %c0_0] : memref<4x84xf32, #tpu.memory_space<vmem>>, vector<4x84xf32>
    %cst = arith.constant dense<0.000000e+00> : vector<4xf32>
    %1 = vector.multi_reduction <add>, %0, %cst [1] : vector<4x84xf32> to vector<4xf32>
    %2 = vector.shape_cast %1 : vector<4xf32> to vector<4x1xf32>
    %cst_1 = arith.constant 0.0119047621 : f32
    %3 = vector.broadcast %cst_1 : f32 to vector<4x1xf32>
    %4 = arith.mulf %2, %3 : vector<4x1xf32>
    %5 = vector.broadcast %4 : vector<4x1xf32> to vector<4x84xf32>
    %6 = arith.subf %0, %5 : vector<4x84xf32>
    %7 = arith.mulf %6, %6 : vector<4x84xf32>
    %cst_2 = arith.constant dense<0.000000e+00> : vector<4xf32>
    %8 = vector.multi_reduction <add>, %7, %cst_2 [1] : vector<4x84xf32> to vector<4xf32>
    %9 = vector.shape_cast %8 : vector<4xf32> to vector<4x1xf32>
    %cst_3 = arith.constant 0.0119047621 : f32
    %10 = vector.broadcast %cst_3 : f32 to vector<4x1xf32>
    %11 = arith.mulf %9, %10 : vector<4x1xf32>
    %cst_4 = arith.constant 9.99999974E-6 : f32
    %12 = vector.broadcast %cst_4 : f32 to vector<4x1xf32>
    %13 = arith.addf %11, %12 : vector<4x1xf32>
    %14 = math.rsqrt %13 : vector<4x1xf32>
    %15 = vector.broadcast %14 : vector<4x1xf32> to vector<4x84xf32>
    %16 = arith.mulf %6, %15 : vector<4x84xf32>
    %c0_5 = arith.constant 0 : index
    %c0_6 = arith.constant 0 : index
    %17 = vector.load %arg2[%c0_5, %c0_6] : memref<4x84xf32, #tpu.memory_space<vmem>>, vector<4x84xf32>
    tpu.vector_store %arg2[%c0_5, %c0_6], %16 {strides = array<i32>} : memref<4x84xf32, #tpu.memory_space<vmem>>, vector<4x84xf32>,
    return
  }
  func.func @transform_0(%arg0: i32) -> (i32, i32) {
    %c0_i32 = arith.constant 0 : i32
    %c0_i32_0 = arith.constant 0 : i32
    return %arg0, %c0_i32 : i32, i32
  }
  func.func @transform_1(%arg0: i32) -> (i32, i32) {
    %c0_i32 = arith.constant 0 : i32
    %c0_i32_0 = arith.constant 0 : i32
    return %arg0, %c0_i32 : i32, i32
  }
}

</mosaic_0001>

<llo_original>
// kernel: tpu_custom_call.1
$region0: #{tpu_custom_call.1}
  #allocation0 [shape = 'u32[]', space=smem, size = 0x4, offset = 0x4, fixed_abs, tag = 'smem constant byte address 0x4 - core index']
  #allocation1 [shape = 'u32[144,128]{1,0:T(1,128)}', space=vmem, size = 0x12000, scoped, tag = 'internal scratch']
  %s0 = inlined_call_operand.hbm [shape: f32[4,84], index: 0, kind: input, shape index: {}]
  %s1 = inlined_call_operand.hbm [shape: f32[4,84], index: 1, kind: output, shape index: {}]
  %s2 = sld [smem:[#allocation0]]
  $region18: #{tpu_custom_call.1} parent=0
    _
  %s4 = ssub.s32 1, %s2
  %s5 = scalar_select 0, %s4, %s2
  $region1: #{tpu_custom_call.1} parent=0
    #allocation2 [shape = 'u8[2048]{0}', space=vmem, size = 0x800, scoped, tag = 'input window, operand 0, single buffered']
    #allocation3 [shape = 's32[1]{0}', space=sflag, size = 0x4, scoped, tag = 'scoped memory for tpu_custom_call.1']
    #allocation4 [shape = 's32[1]{0}', space=sflag, size = 0x4, scoped, tag = 'scoped memory for tpu_custom_call.1']
    #allocation5 [shape = 'u8[2048]{0}', space=vmem, size = 0x800, scoped, tag = 'output window, operand 0, single buffered']
    %6 = vsyncpa [#allocation3], 0
    %7 = vsyncpa [#allocation4], 0
    // Predicated region
    $region2: #{tpu_custom_call.1} parent=1 // pred_check
      _
    $region3: #{tpu_custom_call.1} parent=1 // pred_check_branch
      %9 = sbr.rel (0) target = $region5
    $region4: #{tpu_custom_call.1} parent=1 // pred_region
      %s11 = ssub.s32 64, 64
      %12 = vsyncadd [#allocation3], %s11
      %s14 = sshll.u32 [#allocation2], 4
      %s15 = int_to_ptr.vmem [resolvable:$true] %s14
      %17 = dma.hbm_to_vmem [thread:$0]  %s0, 64, %s15, [#allocation3]
    $region5: #{tpu_custom_call.1} parent=1 // pred_fallthru
      _
    // Predicated region
    $region6: #{tpu_custom_call.1} parent=1 // pred_check
      _
    $region7: #{tpu_custom_call.1} parent=1 // pred_check_branch
      %19 = sbr.rel (0) target = $region9
    $region8: #{tpu_custom_call.1} parent=1 // pred_region
      %20 = dma.done [#allocation3], 64
    $region9: #{tpu_custom_call.1} parent=1 // pred_fallthru
      _
    %v21 = vld [vmem:[#allocation2] sm:$0xf]
    %vm22 = vcmask 683008
    %v23 = vsel %vm22, %v21, 0.0
    %24 = vadd.xlane.f32.xlu0 %v23
    %v25 = vpop.xlane.xlu0 %24
    %v26 = vmul.f32 %v25, 0.011904762
    %v27 = vsub.f32 %v21, %v26
    %v28 = vmul.f32 %v27, %v27
    %v29 = vsel %vm22, %v28, 0.0
    %30 = vadd.xlane.f32.xlu0 %v29
    %v31 = vpop.xlane.xlu0 %30
    %v32 = vmul.f32 %v31, 0.011904762
    %v33 = vadd.f32 %v32, 1e-05
    %v34 = vrsqrt.pop %v33
    %v35 = vmul.f32 %v27, %v34
    %36 = vst.msk [vmem:[#allocation5] sm:$0xf] %vm22, %v35
    // Predicated region
    $region10: #{tpu_custom_call.1} parent=1 // pred_check
      _
    $region11: #{tpu_custom_call.1} parent=1 // pred_check_branch
      %38 = sbr.rel (0) target = $region13
    $region12: #{tpu_custom_call.1} parent=1 // pred_region
      %s40 = ssub.s32 64, 64
      %41 = vsyncadd [#allocation4], %s40
      %s43 = sshll.u32 [#allocation5], 4
      %s44 = int_to_ptr.vmem [resolvable:$true] %s43
      %46 = dma.vmem_to_hbm [thread:$0]  %s44, 64, %s1, [#allocation4]
    $region13: #{tpu_custom_call.1} parent=1 // pred_fallthru
      _
    // Predicated region
    $region14: #{tpu_custom_call.1} parent=1 // pred_check
      _
    $region15: #{tpu_custom_call.1} parent=1 // pred_check_branch
      %48 = sbr.rel (0) target = $region17
    $region16: #{tpu_custom_call.1} parent=1 // pred_region
      %49 = dma.done [#allocation4], 64
    $region17: #{tpu_custom_call.1} parent=1 // pred_fallthru
      _
    %50 = vsyncpa [#allocation3], 1
    %51 = vsyncpa [#allocation4], 1

</llo_original>
